<compile_context>
chip_gen: v6e
topology: v6e:2x2x1
jax: 0.10.0
libtpu: 0.0.40
codegen_flags: <defaults>
</compile_context>

<pallas_src>
import functools

import numpy as np
import jax
import jax.numpy as jnp
from jax.experimental import pallas as pl
from jax.experimental.pallas import tpu as pltpu

EPS = 1e-5


# ---------------------------------------------------------------------------
# Gabor filter bank construction (plain numpy, identical to the PyTorch
# reference `gabor` / `gabor_bank` math).
# ---------------------------------------------------------------------------
def gabor_np(theta, kernel_size, sigma_x=0.075, sigma_y=0.75, Lambda=0.2, psi=0.0):
    y, x = np.meshgrid(np.linspace(-0.5, 0.5, kernel_size),
                       np.linspace(-0.5, 0.5, kernel_size))
    x_theta = x * np.cos(theta) - y * np.sin(theta)
    y_theta = x * np.sin(theta) + y * np.cos(theta)
    gb = np.exp(-0.5 * (x_theta ** 2 / sigma_x ** 2 + y_theta ** 2 / sigma_y ** 2)) \
         * np.cos(2 * np.pi / Lambda * x_theta + psi)
    return gb.astype(np.float32)


def gabor_filter_bank(kernel_size, min_angle=-45.0, max_angle=45.0, angle_step=15.0):
    angles = np.deg2rad(np.arange(min_angle, max_angle + 90.0 + angle_step, angle_step))
    filters = [gabor_np(a, kernel_size) / kernel_size
               for a in (angles + np.pi / 2).tolist()]
    n_angles = (len(angles) - 1) // 2 + 1
    # bank_v = filters[:n_angles], bank_h = filters[n_angles-1:]
    return filters, n_angles


# ---------------------------------------------------------------------------
# Banded-Toeplitz bank: T[kh, wv, fi*W + w] = filt[fi, kh, kw] with
# wv = w + kw - pad (taps falling into the zero-padded W border are dropped,
# which is exactly what 'same' zero padding computes).  Near-zero taps pruned.
# ---------------------------------------------------------------------------
def _build_toeplitz(filt, W, prune_eps=1e-7):
    K = filt.shape[-1]
    pad = (K - 1) // 2
    T = np.zeros((K, W, 4 * W), np.float32)
    w = np.arange(W)
    for fi in range(4):
        for kh in range(K):
            for kw in range(K):
                tap = float(filt[fi, kh, kw])
                if abs(tap) < prune_eps:          # prune numerically-zero gabor taps
                    continue
                wv = w + kw - pad
                m = (wv >= 0) & (wv < W)
                T[kh, wv[m], fi * W + w[m]] = tap
    return T


_TOEPLITZ_CACHE = {}


def _get_toeplitz_bank(f_sel, W, dtype):
    """Cached (K, W, 4W) device-resident Toeplitz bank (built once per idx/W)."""
    key = (int(W), dtype, f_sel.shape, f_sel.tobytes())
    bank = _TOEPLITZ_CACHE.get(key)
    if bank is None:
        bank = jnp.asarray(_build_toeplitz(f_sel, W), dtype=dtype)
        _TOEPLITZ_CACHE[key] = bank
    return bank


# ---------------------------------------------------------------------------
# Generation-aware VMEM budgeting.
# ---------------------------------------------------------------------------
def _vmem_capacity_bytes():
    try:
        return int(pltpu.get_tpu_info().vmem_capacity_bytes)
    except Exception:
        return 64 * 2 ** 20          # conservative (v7x-class)


def _vmem_limit_bytes(estimate_bytes, cap):
    if cap <= 64 * 2 ** 20:
        hi = cap - (8 << 20)         # v7x-class: ~56 MiB, leave compiler headroom
    else:
        hi = int(cap * 0.82)         # v5e/v6e-class: ~105 MiB of 128 MiB
    want = max(32 << 20, int(estimate_bytes) + (8 << 20))
    return int(min(hi, want))


def _pick_hw_tile(HW, target=8192):
    """Largest divisor of HW that is a multiple of 128 and <= target."""
    if HW <= target:
        return HW
    for cand in range(target, 127, -128):
        if HW % cand == 0:
            return cand
    return HW


# ---------------------------------------------------------------------------
# Kernel 1: gating path, spatially tiled two-pass GroupNorm.
# Grid = (N, 2 phases, HW tiles); lane-dense (C, THW) layout.
#   phase 0: accumulate per-group sum / sum-of-squares of h = conv1(x,g)
#   phase 1: recompute h, normalize, affine+ReLU, C->1 conv, write gate logit z
# ---------------------------------------------------------------------------
def _gate_kernel(xin_ref, xgt_ref, w1a_ref, w1b_ref, pp_ref, z_ref,
                 gsum_ref, gss_ref, *, num_groups, total_hw, eps):
    phase = pl.program_id(1)
    t = pl.program_id(2)

    x = xin_ref[0]                                    # (C, THW)
    g = xgt_ref[0]                                    # (Cg, THW)
    pp = pp_ref[...]                                  # (C, 4) = [b1 | gamma1 | beta1 | w2]

    # 1x1 conv with split weights (no HBM concat of the two inputs).
    h = (jnp.dot(w1a_ref[...], x, preferred_element_type=jnp.float32)
         + jnp.dot(w1b_ref[...], g, preferred_element_type=jnp.float32)
         + pp[:, 0:1])                                # (C, THW)
    C, THW = h.shape
    cpg = C // num_groups                             # == 8, layout-preserving split
    h3 = h.reshape(num_groups, cpg, THW)

    @pl.when(jnp.logical_and(phase == 0, t == 0))
    def _():
        gsum_ref[...] = jnp.zeros_like(gsum_ref)
        gss_ref[...] = jnp.zeros_like(gss_ref)

    # Phase 0: streaming GroupNorm statistics over the HW tiles of this image.
    @pl.when(phase == 0)
    def _():
        gsum_ref[...] += jnp.sum(jnp.sum(h3, axis=2, keepdims=True),
                                 axis=1, keepdims=True)
        gss_ref[...] += jnp.sum(jnp.sum(h3 * h3, axis=2, keepdims=True),
                                axis=1, keepdims=True)

    # Phase 1: normalize with the completed stats, ReLU, 1x1 conv to 1 channel.
    @pl.when(phase == 1)
    def _():
        inv_n = 1.0 / float(cpg * total_hw)
        mean_g = gsum_ref[...] * inv_n                               # (G,1,1)
        var_g = jnp.maximum(gss_ref[...] * inv_n - mean_g * mean_g, 0.0)
        rstd_g = jax.lax.rsqrt(var_g + eps)
        hn = ((h3 - mean_g) * rstd_g).reshape(C, THW)
        h1 = jnp.maximum(hn * pp[:, 1:2] + pp[:, 2:3], 0.0)          # affine + ReLU
        # C -> 1 conv on the VPU/XLU (MXU would be ~idle at this shape).
        z = jnp.sum(h1 * pp[:, 3:4], axis=0, keepdims=True)          # (1, THW)
        z_ref[0] = z.astype(z_ref.dtype)


# ---------------------------------------------------------------------------
# Kernel 2: fused gating + 'same' padding + four depthwise KxK gabor convs.
# Grid = (N, C//CB); the K filter rows run as a Python-unrolled in-kernel loop
# (static offsets) against a VMEM-resident bf16 banded-Toeplitz bank.
#   x : (1, CB, H, W)   alpha : (1, H, W)   T : (K, W, 4W) bf16
#   out : (1, 2, CB, H, W)   [v responses in slot 0, h responses in slot 1]
# ---------------------------------------------------------------------------
def _gabor_kernel(x_ref, a_ref, t_ref, out_ref, xpad_ref, acc_ref,
                  *, H, W, pad, CB, K):
    # Gate and zero-pad (H only; W padding is folded into the Toeplitz bank)
    # into the VMEM scratch once per (n, channel-block).
    gated = x_ref[0] * a_ref[...]                     # (CB, H, W) * (1, H, W)
    if pad > 0:
        zeros = jnp.zeros((CB, pad, W), xpad_ref.dtype)
        xpad_ref[:, :pad, :] = zeros
        xpad_ref[:, pad + H:, :] = zeros
    xpad_ref[:, pad:pad + H, :] = gated.astype(xpad_ref.dtype)

    # One MXU matmul per filter row kh: static row offsets (unrolled) so the
    # sublane shifts schedule against the MXU; operands cast to bf16 for
    # native MXU rate, accumulation stays f32.
    for kh in range(K):
        rows = xpad_ref[:, kh:kh + H, :].astype(jnp.bfloat16).reshape(CB * H, W)
        part = jnp.dot(rows, t_ref[kh], preferred_element_type=jnp.float32)
        if kh == 0:
            acc_ref[...] = part                       # init from first row (no zeros pass)
        else:
            acc_ref[...] += part

    # Epilogue: relu each response, pairwise sum, write straight into the
    # (N, 2, C, H, W) output block ((N, 2C, H, W) is a free reshape away).
    acc = acc_ref[...]
    r0 = jnp.maximum(acc[:, 0 * W:1 * W], 0.0)
    r1 = jnp.maximum(acc[:, 1 * W:2 * W], 0.0)
    r2 = jnp.maximum(acc[:, 2 * W:3 * W], 0.0)
    r3 = jnp.maximum(acc[:, 3 * W:4 * W], 0.0)
    out_ref[0, 0] = (r0 + r1).reshape(CB, H, W).astype(out_ref.dtype)
    out_ref[0, 1] = (r2 + r3).reshape(CB, H, W).astype(out_ref.dtype)


# ---------------------------------------------------------------------------
# Wrapper
# ---------------------------------------------------------------------------
def gated_gabor_forward(input_features, gating_features, idx, params, filters,
                        n_angles, out_dtype=jnp.float32):
    """input_features: (N, C, H, W), gating_features: (N, C//4, H, W)  [NCHW]."""
    if idx == 255:
        idx = 0
    w1, b1, g1, be1, w2, b2, g2w, g2b = params

    N, C, H, W = input_features.shape
    Cg = gating_features.shape[1]
    HW = H * W
    K = filters[0].shape[0]
    pad = (K - 1) // 2
    num_groups = C // 8
    assert C % 8 == 0 and C % num_groups == 0

    cap = _vmem_capacity_bytes()

    # --- Stage 1: gate logits z (spatially tiled, two passes) --------------
    THW = _pick_hw_tile(HW)
    n_t = HW // THW

    x3 = input_features.reshape(N, C, HW)             # metadata-only reshape
    g3 = gating_features.reshape(N, Cg, HW)
    w1a = w1[:, :C]                                   # (C, C)
    w1b = w1[:, C:]                                   # (C, Cg)
    pp = jnp.stack([b1, g1, be1, w2], axis=1)         # (C, 4) packed per-channel params

    est_gate = 4 * THW * (2 * C + 2 * Cg + 5 * C + 2) + 4 * C * (C + Cg + 4)
    z = pl.pallas_call(
        functools.partial(_gate_kernel, num_groups=num_groups,
                          total_hw=HW, eps=EPS),
        out_shape=jax.ShapeDtypeStruct((N, 1, HW), jnp.float32),
        grid=(N, 2, n_t),
        in_specs=[
            pl.BlockSpec((1, C, THW), lambda n, p, t: (n, 0, t)),
            pl.BlockSpec((1, Cg, THW), lambda n, p, t: (n, 0, t)),
            pl.BlockSpec((C, C), lambda n, p, t: (0, 0)),
            pl.BlockSpec((C, Cg), lambda n, p, t: (0, 0)),
            pl.BlockSpec((C, 4), lambda n, p, t: (0, 0)),
        ],
        # Phase 0 never writes; keep its block index parked at tile 0 so no
        # redundant HBM write-backs happen before phase 1 fills the block.
        out_specs=pl.BlockSpec((1, 1, THW), lambda n, p, t: (n, 0, p * t)),
        scratch_shapes=[
            pltpu.VMEM((num_groups, 1, 1), jnp.float32),   # per-group sum
            pltpu.VMEM((num_groups, 1, 1), jnp.float32),   # per-group sum of squares
        ],
        compiler_params=pltpu.CompilerParams(
            dimension_semantics=("parallel", "arbitrary", "arbitrary"),
            vmem_limit_bytes=_vmem_limit_bytes(est_gate, cap)),
    )(x3, g3, w1a, w1b, pp)

    # GroupNorm(1, 1) + sigmoid on the tiny (N, 1, H*W) single-channel logit
    # stays in plain JAX (negligible work; keeps b2/g2w/g2b traceable).
    z = z.reshape(N, HW) + b2
    mz = jnp.mean(z, axis=1, keepdims=True)
    vz = jnp.mean(jnp.square(z - mz), axis=1, keepdims=True)
    alpha = jax.nn.sigmoid((z - mz) * jax.lax.rsqrt(vz + EPS) * g2w + g2b)
    alpha = alpha.reshape(N, H, W)                    # metadata-only reshape

    # --- Stage 2: fused gating + gabor depthwise convs ----------------------
    # bank_v = filters[:n_angles]; bank_h = filters[n_angles-1:]
    f_sel = np.stack([filters[idx], filters[idx + 1],
                      filters[n_angles - 1 + idx], filters[n_angles - 1 + idx + 1]],
                     axis=0)                          # (4, K, K)
    T = _get_toeplitz_bank(f_sel, W, jnp.bfloat16)    # cached (K, W, 4W) bf16

    if cap >= 96 * 2 ** 20 and C % 16 == 0:
        CB = 16                                       # 128 MiB chips: bigger blocks
    elif C % 8 == 0:
        CB = 8                                        # v7x-class 64 MiB budget
    else:
        CB = C
    n_cb = C // CB
    Hp = H + 2 * pad
    out_bytes = np.dtype(out_dtype).itemsize

    est_gabor = (2 * CB * H * W * 4                   # input blocks (f32, double buffered)
                 + 2 * H * W * 4                      # alpha blocks
                 + 2 * K * W * 4 * W * 2              # resident Toeplitz bank (bf16)
                 + 2 * 2 * CB * H * W * out_bytes     # output blocks
                 + CB * Hp * W * 4                    # xpad scratch (f32)
                 + CB * H * 4 * W * 4)                # f32 accumulator scratch

    out5 = pl.pallas_call(
        functools.partial(_gabor_kernel, H=H, W=W, pad=pad, CB=CB, K=K),
        out_shape=jax.ShapeDtypeStruct((N, 2, C, H, W), out_dtype),
        grid=(N, n_cb),
        in_specs=[
            pl.BlockSpec((1, CB, H, W), lambda n, cb: (n, cb, 0, 0)),
            pl.BlockSpec((1, H, W), lambda n, cb: (n, 0, 0)),
            pl.BlockSpec((K, W, 4 * W), lambda n, cb: (0, 0, 0)),  # VMEM-resident bank
        ],
        out_specs=pl.BlockSpec((1, 2, CB, H, W), lambda n, cb: (n, 0, cb, 0, 0)),
        scratch_shapes=[
            pltpu.VMEM((CB, Hp, W), jnp.float32),     # gated + H-padded block
            pltpu.VMEM((CB * H, 4 * W), jnp.float32), # fused accumulator (4 filters)
        ],
        compiler_params=pltpu.CompilerParams(
            dimension_semantics=("parallel", "parallel"),
            vmem_limit_bytes=_vmem_limit_bytes(est_gabor, cap)),
    )(input_features, alpha, T)

    return out5.reshape(N, 2 * C, H, W)               # metadata-only reshape


# ---------------------------------------------------------------------------
# Pure-JAX reference (same math, no Pallas) for a correctness check.
# ---------------------------------------------------------------------------
def reference_forward(input_features, gating_features, idx, params, filters, n_angles):
    if idx == 255:
        idx = 0
    w1, b1, g1, be1, w2, b2, g2w, g2b = params
    N, C, H, W = input_features.shape
    K = filters[0].shape[0]
    pad = (K - 1) // 2

    cat = jnp.concatenate([input_features, gating_features], axis=1)     # (N, Ct, H, W)
    h = jnp.einsum('oc,nchw->nohw', w1, cat) + b1.reshape(1, C, 1, 1)
    G = C // 8
    h_ = h.reshape(N, G, C // G, H, W)
    mean = h_.mean(axis=(2, 3, 4), keepdims=True)
    var = ((h_ - mean) ** 2).mean(axis=(2, 3, 4), keepdims=True)
    hn = ((h_ - mean) / jnp.sqrt(var + EPS)).reshape(N, C, H, W)
    h1 = jax.nn.relu(hn * g1.reshape(1, C, 1, 1) + be1.reshape(1, C, 1, 1))

    z = jnp.einsum('c,nchw->nhw', w2, h1)[:, None] + b2                  # (N, 1, H, W)
    mz = z.mean(axis=(1, 2, 3), keepdims=True)
    vz = ((z - mz) ** 2).mean(axis=(1, 2, 3), keepdims=True)
    zn = (z - mz) / jnp.sqrt(vz + EPS) * g2w + g2b
    alpha = jax.nn.sigmoid(zn)

    gated = input_features * alpha
    gpad = jnp.pad(gated, ((0, 0), (0, 0), (pad, pad), (pad, pad)))

    def dconv(f):
        out = jnp.zeros_like(gated)
        for kh in range(K):
            for kw in range(K):
                out = out + gpad[:, :, kh:kh + H, kw:kw + W] * float(f[kh, kw])
        return out

    xv = jax.nn.relu(dconv(filters[idx])) + jax.nn.relu(dconv(filters[idx + 1]))
    xh = (jax.nn.relu(dconv(filters[n_angles - 1 + idx]))
          + jax.nn.relu(dconv(filters[n_angles - 1 + idx + 1])))
    return jnp.concatenate([xv, xh], axis=1)


if __name__ == "__main__":
    # Small shapes consistent with the module: C divisible by 8 (GroupNorm)
    # and by 4 (gating channels).  kernel_size defaults to 35 in the module;
    # use 7 here to keep the demo small (the kernel structure is identical).
    N, C, H, W = 2, 16, 16, 16
    K = 7
    idx = 2

    filters, n_angles = gabor_filter_bank(K)
    Cg = C // 4
    Ct = C + Cg

    key = jax.random.PRNGKey(0)
    kx, kg, k1, k2, k3, k4, k5 = jax.random.split(key, 7)
    x = jax.random.normal(kx, (N, C, H, W), jnp.float32)
    g = jax.random.normal(kg, (N, Cg, H, W), jnp.float32)

    # Deterministic synthetic parameters (PyTorch layout: Conv2d weight (C_out, C_in)).
    # TODO(synk): `init_conv` is not defined in the reference source; a
    # deterministic random init is used here instead.
    w1 = jax.random.normal(k1, (C, Ct), jnp.float32) / np.sqrt(Ct)   # Conv2d(Ct->C, 1x1)
    b1 = jax.random.normal(k2, (C,), jnp.float32) * 0.01
    g1 = 1.0 + 0.1 * jax.random.normal(k4, (C,), jnp.float32)        # GroupNorm(C//8, C)
    be1 = 0.1 * jax.random.normal(k5, (C,), jnp.float32)
    w2 = jax.random.normal(k3, (C,), jnp.float32) / np.sqrt(C)       # Conv2d(C->1, 1x1)
    b2, g2w, g2b = 0.05, 1.3, -0.2                                   # GroupNorm(1, 1)
    params = (w1, b1, g1, be1, w2, b2, g2w, g2b)

    out = gated_gabor_forward(x, g, idx, params, filters, n_angles)
    out = jax.block_until_ready(out)

    assert out.shape == (N, 2 * C, H, W), out.shape
    assert bool(jnp.all(jnp.isfinite(out)))

    ref = reference_forward(x, g, idx, params, filters, n_angles)
    # bf16 MXU operands in stage 2 (f32 accumulation) stay within this tolerance.
    np.testing.assert_allclose(np.asarray(out), np.asarray(ref), rtol=2e-2, atol=2e-2)

    print("KERNEL_OK")
</pallas_src>

<mosaic_0001>
module attributes {stable_mosaic.version = 11 : i64} {
  func.func @_gate_kernel(%arg0: i32, %arg1: i32, %arg2: i32, %arg3: memref<1x16x256xf32, #tpu.memory_space<vmem>>, %arg4: memref<1x4x256xf32, #tpu.memory_space<vmem>>, %arg5: memref<16x16xf32, #tpu.memory_space<vmem>>, %arg6: memref<16x4xf32, #tpu.memory_space<vmem>>, %arg7: memref<16x4xf32, #tpu.memory_space<vmem>>, %arg8: memref<1x1x256xf32, #tpu.memory_space<vmem>>, %arg9: memref<2x1x1xf32, #tpu.memory_space<vmem>>, %arg10: memref<2x1x1xf32, #tpu.memory_space<vmem>>) attributes {dimension_semantics = [#tpu.dimension_semantics<parallel>, #tpu.dimension_semantics<arbitrary>, #tpu.dimension_semantics<arbitrary>], iteration_bounds = array<i64: 2, 2, 1>, scalar_prefetch = 0 : i64, scratch_operands = 2 : i64, tpu.core_type = #tpu.core_type<tc>, window_params = [{transform_indices = @transform_0, window_bounds = array<i64: 1, 16, 256>}, {transform_indices = @transform_1, window_bounds = array<i64: 1, 4, 256>}, {pipeline_mode = #tpu.pipeline_mode<synchronous>, transform_indices = @transform_2, window_bounds = array<i64: 16, 16>}, {pipeline_mode = #tpu.pipeline_mode<synchronous>, transform_indices = @transform_3, window_bounds = array<i64: 16, 4>}, {pipeline_mode = #tpu.pipeline_mode<synchronous>, transform_indices = @transform_4, window_bounds = array<i64: 16, 4>}, {transform_indices = @transform_5, window_bounds = array<i64: 1, 1, 256>}]} {
    %c0 = arith.constant 0 : index
    %c0_0 = arith.constant 0 : index
    %c0_1 = arith.constant 0 : index
    %0 = vector.load %arg3[%c0, %c0_0, %c0_1] : memref<1x16x256xf32, #tpu.memory_space<vmem>>, vector<1x16x256xf32>
    %1 = vector.shape_cast %0 : vector<1x16x256xf32> to vector<16x256xf32>
    %c0_2 = arith.constant 0 : index
    %c0_3 = arith.constant 0 : index
    %c0_4 = arith.constant 0 : index
    %2 = vector.load %arg4[%c0_2, %c0_3, %c0_4] : memref<1x4x256xf32, #tpu.memory_space<vmem>>, vector<1x4x256xf32>
    %3 = vector.shape_cast %2 : vector<1x4x256xf32> to vector<4x256xf32>
    %c0_5 = arith.constant 0 : index
    %c0_6 = arith.constant 0 : index
    %4 = vector.load %arg7[%c0_5, %c0_6] : memref<16x4xf32, #tpu.memory_space<vmem>>, vector<16x4xf32>
    %c0_7 = arith.constant 0 : index
    %c0_8 = arith.constant 0 : index
    %5 = vector.load %arg5[%c0_7, %c0_8] : memref<16x16xf32, #tpu.memory_space<vmem>>, vector<16x16xf32>
    %cst = arith.constant dense<0.000000e+00> : vector<16x256xf32>
    %6 = tpu.matmul %5, %1, %cst {dimension_numbers = #tpu.dot_dimension_numbers<[1], [0], [0], [1], [0, 0, 1, 1], [], []>} : vector<16x16xf32>, vector<16x256xf32>, vector<16x256xf32> -> vector<16x256xf32>
    %c0_9 = arith.constant 0 : index
    %c0_10 = arith.constant 0 : index
    %7 = vector.load %arg6[%c0_9, %c0_10] : memref<16x4xf32, #tpu.memory_space<vmem>>, vector<16x4xf32>
    %cst_11 = arith.constant dense<0.000000e+00> : vector<16x256xf32>
    %8 = tpu.matmul %7, %3, %cst_11 {dimension_numbers = #tpu.dot_dimension_numbers<[1], [0], [0], [1], [0, 0, 1, 1], [], []>} : vector<16x4xf32>, vector<4x256xf32>, vector<16x256xf32> -> vector<16x256xf32>
    %9 = arith.addf %6, %8 : vector<16x256xf32>
    %10 = vector.extract_strided_slice %4 {offsets = [0, 0], sizes = [16, 1], strides = [1, 1]} : vector<16x4xf32> to vector<16x1xf32>
    %11 = vector.broadcast %10 : vector<16x1xf32> to vector<16x256xf32>
    %12 = arith.addf %9, %11 : vector<16x256xf32>
    %13 = vector.shape_cast %12 : vector<16x256xf32> to vector<2x8x256xf32>
    %c0_i32 = arith.constant 0 : i32
    %14 = arith.cmpi eq, %arg1, %c0_i32 : i32
    %c0_i32_12 = arith.constant 0 : i32
    %15 = arith.cmpi eq, %arg2, %c0_i32_12 : i32
    %16 = arith.andi %14, %15 : i1
    %17 = arith.extui %16 : i1 to i32
    %c0_i32_13 = arith.constant 0 : i32
    %18 = arith.cmpi ne, %17, %c0_i32_13 : i32
    scf.if %18 {
      %cst_17 = arith.constant 0.000000e+00 : f32
      %25 = vector.broadcast %cst_17 : f32 to vector<2x1x1xf32>
      %c0_18 = arith.constant 0 : index
      %c0_19 = arith.constant 0 : index
      %c0_20 = arith.constant 0 : index
      %26 = vector.load %arg9[%c0_18, %c0_19, %c0_20] : memref<2x1x1xf32, #tpu.memory_space<vmem>>, vector<2x1x1xf32>
      tpu.vector_store %arg9[%c0_18, %c0_19, %c0_20], %25 {strides = array<i32>} : memref<2x1x1xf32, #tpu.memory_space<vmem>>, vector<2x1x1xf32>,
      %cst_21 = arith.constant 0.000000e+00 : f32
      %27 = vector.broadcast %cst_21 : f32 to vector<2x1x1xf32>
      %c0_22 = arith.constant 0 : index
      %c0_23 = arith.constant 0 : index
      %c0_24 = arith.constant 0 : index
      %28 = vector.load %arg10[%c0_22, %c0_23, %c0_24] : memref<2x1x1xf32, #tpu.memory_space<vmem>>, vector<2x1x1xf32>
      tpu.vector_store %arg10[%c0_22, %c0_23, %c0_24], %27 {strides = array<i32>} : memref<2x1x1xf32, #tpu.memory_space<vmem>>, vector<2x1x1xf32>,
    } else {
    }
    %c0_i32_14 = arith.constant 0 : i32
    %19 = arith.cmpi eq, %arg1, %c0_i32_14 : i32
    %20 = arith.extui %19 : i1 to i32
    %c0_i32_15 = arith.constant 0 : i32
    %21 = arith.cmpi ne, %20, %c0_i32_15 : i32
    scf.if %21 {
      %c0_17 = arith.constant 0 : index
      %c0_18 = arith.constant 0 : index
      %c0_19 = arith.constant 0 : index
      %25 = vector.load %arg9[%c0_17, %c0_18, %c0_19] : memref<2x1x1xf32, #tpu.memory_space<vmem>>, vector<2x1x1xf32>
      %cst_20 = arith.constant dense<0.000000e+00> : vector<2x8xf32>
      %26 = vector.multi_reduction <add>, %13, %cst_20 [2] : vector<2x8x256xf32> to vector<2x8xf32>
      %27 = vector.shape_cast %26 : vector<2x8xf32> to vector<2x8x1xf32>
      %cst_21 = arith.constant dense<0.000000e+00> : vector<2x1xf32>
      %28 = vector.multi_reduction <add>, %27, %cst_21 [1] : vector<2x8x1xf32> to vector<2x1xf32>
      %29 = vector.shape_cast %28 : vector<2x1xf32> to vector<2x1x1xf32>
      %30 = arith.addf %25, %29 : vector<2x1x1xf32>
      %c0_22 = arith.constant 0 : index
      %c0_23 = arith.constant 0 : index
      %c0_24 = arith.constant 0 : index
      %31 = vector.load %arg9[%c0_22, %c0_23, %c0_24] : memref<2x1x1xf32, #tpu.memory_space<vmem>>, vector<2x1x1xf32>
      tpu.vector_store %arg9[%c0_22, %c0_23, %c0_24], %30 {strides = array<i32>} : memref<2x1x1xf32, #tpu.memory_space<vmem>>, vector<2x1x1xf32>,
      %c0_25 = arith.constant 0 : index
      %c0_26 = arith.constant 0 : index
      %c0_27 = arith.constant 0 : index
      %32 = vector.load %arg10[%c0_25, %c0_26, %c0_27] : memref<2x1x1xf32, #tpu.memory_space<vmem>>, vector<2x1x1xf32>
      %33 = arith.mulf %13, %13 : vector<2x8x256xf32>
      %cst_28 = arith.constant dense<0.000000e+00> : vector<2x8xf32>
      %34 = vector.multi_reduction <add>, %33, %cst_28 [2] : vector<2x8x256xf32> to vector<2x8xf32>
      %35 = vector.shape_cast %34 : vector<2x8xf32> to vector<2x8x1xf32>
      %cst_29 = arith.constant dense<0.000000e+00> : vector<2x1xf32>
      %36 = vector.multi_reduction <add>, %35, %cst_29 [1] : vector<2x8x1xf32> to vector<2x1xf32>
      %37 = vector.shape_cast %36 : vector<2x1xf32> to vector<2x1x1xf32>
      %38 = arith.addf %32, %37 : vector<2x1x1xf32>
      %c0_30 = arith.constant 0 : index
      %c0_31 = arith.constant 0 : index
      %c0_32 = arith.constant 0 : index
      %39 = vector.load %arg10[%c0_30, %c0_31, %c0_32] : memref<2x1x1xf32, #tpu.memory_space<vmem>>, vector<2x1x1xf32>
      tpu.vector_store %arg10[%c0_30, %c0_31, %c0_32], %38 {strides = array<i32>} : memref<2x1x1xf32, #tpu.memory_space<vmem>>, vector<2x1x1xf32>,
    } else {
    }
    %c1_i32 = arith.constant 1 : i32
    %22 = arith.cmpi eq, %arg1, %c1_i32 : i32
    %23 = arith.extui %22 : i1 to i32
    %c0_i32_16 = arith.constant 0 : i32
    %24 = arith.cmpi ne, %23, %c0_i32_16 : i32
    scf.if %24 {
      %c0_17 = arith.constant 0 : index
      %c0_18 = arith.constant 0 : index
      %c0_19 = arith.constant 0 : index
      %25 = vector.load %arg9[%c0_17, %c0_18, %c0_19] : memref<2x1x1xf32, #tpu.memory_space<vmem>>, vector<2x1x1xf32>
      %cst_20 = arith.constant 4.8828125E-4 : f32
      %26 = vector.broadcast %cst_20 : f32 to vector<2x1x1xf32>
      %27 = arith.mulf %25, %26 : vector<2x1x1xf32>
      %c0_21 = arith.constant 0 : index
      %c0_22 = arith.constant 0 : index
      %c0_23 = arith.constant 0 : index
      %28 = vector.load %arg10[%c0_21, %c0_22, %c0_23] : memref<2x1x1xf32, #tpu.memory_space<vmem>>, vector<2x1x1xf32>
      %cst_24 = arith.constant 4.8828125E-4 : f32
      %29 = vector.broadcast %cst_24 : f32 to vector<2x1x1xf32>
      %30 = arith.mulf %28, %29 : vector<2x1x1xf32>
      %31 = arith.mulf %27, %27 : vector<2x1x1xf32>
      %32 = arith.subf %30, %31 : vector<2x1x1xf32>
      %cst_25 = arith.constant 0.000000e+00 : f32
      %33 = vector.broadcast %cst_25 : f32 to vector<2x1x1xf32>
      %34 = arith.maximumf %32, %33 : vector<2x1x1xf32>
      %cst_26 = arith.constant 9.99999974E-6 : f32
      %35 = vector.broadcast %cst_26 : f32 to vector<2x1x1xf32>
      %36 = arith.addf %34, %35 : vector<2x1x1xf32>
      %37 = math.rsqrt %36 : vector<2x1x1xf32>
      %38 = vector.broadcast %27 : vector<2x1x1xf32> to vector<2x8x256xf32>
      %39 = arith.subf %13, %38 : vector<2x8x256xf32>
      %40 = vector.broadcast %37 : vector<2x1x1xf32> to vector<2x8x256xf32>
      %41 = arith.mulf %39, %40 : vector<2x8x256xf32>
      %42 = vector.shape_cast %41 : vector<2x8x256xf32> to vector<16x256xf32>
      %43 = vector.extract_strided_slice %4 {offsets = [0, 1], sizes = [16, 1], strides = [1, 1]} : vector<16x4xf32> to vector<16x1xf32>
      %44 = vector.broadcast %43 : vector<16x1xf32> to vector<16x256xf32>
      %45 = arith.mulf %42, %44 : vector<16x256xf32>
      %46 = vector.extract_strided_slice %4 {offsets = [0, 2], sizes = [16, 1], strides = [1, 1]} : vector<16x4xf32> to vector<16x1xf32>
      %47 = vector.broadcast %46 : vector<16x1xf32> to vector<16x256xf32>
      %48 = arith.addf %45, %47 : vector<16x256xf32>
      %cst_27 = arith.constant 0.000000e+00 : f32
      %49 = vector.broadcast %cst_27 : f32 to vector<16x256xf32>
      %50 = arith.maximumf %48, %49 : vector<16x256xf32>
      %51 = vector.extract_strided_slice %4 {offsets = [0, 3], sizes = [16, 1], strides = [1, 1]} : vector<16x4xf32> to vector<16x1xf32>
      %52 = vector.broadcast %51 : vector<16x1xf32> to vector<16x256xf32>
      %53 = arith.mulf %50, %52 : vector<16x256xf32>
      %cst_28 = arith.constant dense<0.000000e+00> : vector<256xf32>
      %54 = vector.multi_reduction <add>, %53, %cst_28 [0] : vector<16x256xf32> to vector<256xf32>
      %55 = vector.shape_cast %54 : vector<256xf32> to vector<1x256xf32>
      %c0_29 = arith.constant 0 : index
      %c0_30 = arith.constant 0 : index
      %c0_31 = arith.constant 0 : index
      %56 = vector.load %arg8[%c0_29, %c0_30, %c0_31] : memref<1x1x256xf32, #tpu.memory_space<vmem>>, vector<1x1x256xf32>
      %57 = vector.shape_cast %56 : vector<1x1x256xf32> to vector<1x256xf32>
      %58 = vector.shape_cast %55 : vector<1x256xf32> to vector<1x1x256xf32>
      tpu.vector_store %arg8[%c0_29, %c0_30, %c0_31], %58 {strides = array<i32>} : memref<1x1x256xf32, #tpu.memory_space<vmem>>, vector<1x1x256xf32>,
    } else {
    }
    return
  }
  func.func @transform_0(%arg0: i32, %arg1: i32, %arg2: i32) -> (i32, i32, i32) {
    %c0_i32 = arith.constant 0 : i32
    %c0_i32_0 = arith.constant 0 : i32
    return %arg0, %c0_i32, %arg2 : i32, i32, i32
  }
  func.func @transform_1(%arg0: i32, %arg1: i32, %arg2: i32) -> (i32, i32, i32) {
    %c0_i32 = arith.constant 0 : i32
    %c0_i32_0 = arith.constant 0 : i32
    return %arg0, %c0_i32, %arg2 : i32, i32, i32
  }
  func.func @transform_2(%arg0: i32, %arg1: i32, %arg2: i32) -> (i32, i32) {
    %c0_i32 = arith.constant 0 : i32
    %c0_i32_0 = arith.constant 0 : i32
    %c0_i32_1 = arith.constant 0 : i32
    return %c0_i32, %c0_i32_0 : i32, i32
  }
  func.func @transform_3(%arg0: i32, %arg1: i32, %arg2: i32) -> (i32, i32) {
    %c0_i32 = arith.constant 0 : i32
    %c0_i32_0 = arith.constant 0 : i32
    %c0_i32_1 = arith.constant 0 : i32
    return %c0_i32, %c0_i32_0 : i32, i32
  }
  func.func @transform_4(%arg0: i32, %arg1: i32, %arg2: i32) -> (i32, i32) {
    %c0_i32 = arith.constant 0 : i32
    %c0_i32_0 = arith.constant 0 : i32
    %c0_i32_1 = arith.constant 0 : i32
    return %c0_i32, %c0_i32_0 : i32, i32
  }
  func.func @transform_5(%arg0: i32, %arg1: i32, %arg2: i32) -> (i32, i32, i32) {
    %0 = arith.muli %arg1, %arg2 : i32
    %c0_i32 = arith.constant 0 : i32
    %c0_i32_0 = arith.constant 0 : i32
    return %arg0, %c0_i32, %0 : i32, i32, i32
  }
}

</mosaic_0001>

<llo_original>
// kernel: tpu_custom_call.1
$region0: #{tpu_custom_call.1}
  #allocation0 [shape = 'u32[]', space=smem, size = 0x4, offset = 0x4, fixed_abs, tag = 'smem constant byte address 0x4 - core index']
  #allocation1 [shape = 'u32[144,128]{1,0:T(1,128)}', space=vmem, size = 0x12000, scoped, tag = 'internal scratch']
  #allocation2 [shape = 'f32[2,1,1]{2,1,0:T(1,128)}', space=vmem, size = 0x400, scoped, tag = 'scratch operand']
  #allocation3 [shape = 'f32[2,1,1]{2,1,0:T(1,128)}', space=vmem, size = 0x400, scoped, tag = 'scratch operand']
  %s0 = inlined_call_operand.hbm [shape: f32[2,16,256], index: 0, kind: input, shape index: {}]
  %s1 = inlined_call_operand.vmem [shape: f32[2,4,256], index: 1, kind: input, shape index: {}]
  %s2 = inlined_call_operand.vmem [shape: f32[16,16], index: 2, kind: input, shape index: {}]
  %s3 = inlined_call_operand.vmem [shape: f32[16,4], index: 3, kind: input, shape index: {}]
  %s4 = inlined_call_operand.vmem [shape: f32[16,4], index: 4, kind: input, shape index: {}]
  %s5 = inlined_call_operand.hbm [shape: f32[2,1,256], index: 5, kind: output, shape index: {}]
  %s6 = sld [smem:[#allocation0]]
  $region69: #{tpu_custom_call.1} parent=0
    _
  %s8 = ssub.s32 1, %s6
  %s9 = scalar_select 0, %s8, %s6
  $region1: #{tpu_custom_call.1} parent=0
    #allocation4 [shape = 'u8[32768]{0}', space=vmem, size = 0x8000, scoped, tag = 'input window, operand 0']
    #allocation5 [shape = 's32[2]{0}', space=sflag, size = 0x8, scoped, tag = 'scoped memory for tpu_custom_call.1']
    #allocation6 [shape = 's32[2]{0}', space=sflag, size = 0x8, scoped, tag = 'scoped memory for tpu_custom_call.1']
    #allocation7 [shape = 'u8[2048]{0}', space=vmem, size = 0x800, scoped, tag = 'output window, operand 0']
    %10 = vsyncpa [#allocation5], 0
    %s11 = scalar_lea.sflag [#allocation5], 1
    %12 = vsyncpa %s11, 0
    %13 = vsyncpa [#allocation6], 0
    %s14 = scalar_lea.sflag [#allocation6], 1
    %15 = vsyncpa %s14, 0
    loop: start=0, step=1, limit=6
    $region2: #{tpu_custom_call.1} parent=1 // loop_pre_header
      _
    $region3: #{tpu_custom_call.1} parent=1 // loop_header
      %s17 = sphi 0, %s21
      %p18 = scmp.ge.s32.totalorder %s17, 6
      %s24 = sphi 0, %s43
      %s25 = sphi 0, %s39
      %s26 = sphi 0, %s35
      %s27 = sphi 0, %s24
      %s28 = sphi 0, %s25
      %s29 = sphi 0, %s26
      %s30 = sphi 0, %s27
      %s31 = sphi 0, %s28
      %s32 = sphi 0, %s29
      %s48 = sphi 0, %s50
      %s51 = sphi 0, %s48
      %s52 = sphi 0, %s51
      %s68 = sphi 0, %s52
      %s76 = sphi 0, %s78
      %s79 = sphi 0, %s76
      %s80 = sphi 0, %s79
      %s96 = sphi 0, %s80
      %s100 = sphi 0, %s100
      %s102 = sphi 0, %s100
      %s103 = sphi 0, %s102
      %s117 = sphi 0, %s103
      %s121 = sphi 0, %s121
      %s123 = sphi 0, %s121
      %s124 = sphi 0, %s123
      %s138 = sphi 0, %s124
      %s142 = sphi 0, %s142
      %s144 = sphi 0, %s142
      %s145 = sphi 0, %s144
      %s159 = sphi 0, %s145
      %s169 = sphi 0, %s171
      %s172 = sphi 0, %s169
      %s173 = sphi 0, %s172
      %s189 = sphi 0, %s173
    $region4: #{tpu_custom_call.1} parent=1 // loop_header_branch
      %20 = sbr.rel (%p18) target = $region8
    $region5: #{tpu_custom_call.1} parent=1 // loop_body
      %s22 = ssub.s32 %s17, 1
      %s23 = ssub.s32 %s17, 2
      %s33 = sadd.s32 1, %s26
      %p34 = scmp.ge.s32.totalorder %s33, 1
      %s35 = scalar_select %p34, 0, %s33
      %s36 = sadd.s32 1, %s25
      %s37 = scalar_select %p34, %s36, %s25
      %p38 = scmp.ge.s32.totalorder %s37, 2
      %s39 = scalar_select %p38, 0, %s37
      %s40 = sadd.s32 1, %s24
      %s41 = scalar_select %p38, %s40, %s24
      %p42 = scmp.ge.s32.totalorder %s41, 2
      %s43 = scalar_select %p42, 0, %s41
      %s44 = ssub.s32 %s24, %s43
      %s45 = ssub.s32 %s26, %s35
      %s46 = sor.u32 %s44, %s45
      %p47 = scmp.eq.s32.totalorder %s46, 0
      %s49 = sadd.s32 %s48, 1
      %s50 = scalar_select %p47, %s48, %s49
      %p53 = pneg %p47
      %p54 = scmp.eq.s32.totalorder %s17, 3
      %p55 = por %p53, %p54
      %p56 = scmp.ne.s32.totalorder %s48, %s51
      %p57 = scmp.eq.s32.totalorder %s17, 0
      %p58 = por %p56, %p57
      %p59 = scmp.ne.s32.totalorder %s48, %s51
      %p60 = scmp.eq.s32.totalorder %s22, 3
      %p61 = por %p59, %p60
      %p62 = scmp.ne.s32.totalorder %s51, %s52
      %p63 = scmp.eq.s32.totalorder %s22, 0
      %p64 = por %p62, %p63
      %p65 = scmp.ne.s32.totalorder %s51, %s52
      %p66 = scmp.eq.s32.totalorder %s23, 3
      %p67 = por %p65, %p66
      %p69 = scmp.ne.s32.totalorder %s52, %s68
      %p70 = scmp.eq.s32.totalorder %s23, 0
      %p71 = por %p69, %p70
      %s72 = ssub.s32 %s24, %s43
      %s73 = ssub.s32 %s26, %s35
      %s74 = sor.u32 %s72, %s73
      %p75 = scmp.eq.s32.totalorder %s74, 0
      %s77 = sadd.s32 %s76, 1
      %s78 = scalar_select %p75, %s76, %s77
      %p81 = pneg %p75
      %p82 = scmp.eq.s32.totalorder %s17, 3
      %p83 = por %p81, %p82
      %p84 = scmp.ne.s32.totalorder %s76, %s79
      %p85 = scmp.eq.s32.totalorder %s17, 0
      %p86 = por %p84, %p85
      %p87 = scmp.ne.s32.totalorder %s76, %s79
      %p88 = scmp.eq.s32.totalorder %s22, 3
      %p89 = por %p87, %p88
      %p90 = scmp.ne.s32.totalorder %s79, %s80
      %p91 = scmp.eq.s32.totalorder %s22, 0
      %p92 = por %p90, %p91
      %p93 = scmp.ne.s32.totalorder %s79, %s80
      %p94 = scmp.eq.s32.totalorder %s23, 3
      %p95 = por %p93, %p94
      %p97 = scmp.ne.s32.totalorder %s80, %s96
      %p98 = scmp.eq.s32.totalorder %s23, 0
      %p99 = por %p97, %p98
      %s101 = sadd.s32 %s100, 1
      %p104 = scmp.eq.s32.totalorder %s17, 3
      %p105 = scmp.ne.s32.totalorder %s100, %s102
      %p106 = scmp.eq.s32.totalorder %s17, 0
      %p107 = por %p105, %p106
      %p108 = scmp.ne.s32.totalorder %s100, %s102
      %p109 = scmp.eq.s32.totalorder %s22, 3
      %p110 = por %p108, %p109
      %p111 = scmp.ne.s32.totalorder %s102, %s103
      %p112 = scmp.eq.s32.totalorder %s22, 0
      %p113 = por %p111, %p112
      %p114 = scmp.ne.s32.totalorder %s102, %s103
      %p115 = scmp.eq.s32.totalorder %s23, 3
      %p116 = por %p114, %p115
      %p118 = scmp.ne.s32.totalorder %s103, %s117
      %p119 = scmp.eq.s32.totalorder %s23, 0
      %p120 = por %p118, %p119
      %s122 = sadd.s32 %s121, 1
      %p125 = scmp.eq.s32.totalorder %s17, 3
      %p126 = scmp.ne.s32.totalorder %s121, %s123
      %p127 = scmp.eq.s32.totalorder %s17, 0
      %p128 = por %p126, %p127
      %p129 = scmp.ne.s32.totalorder %s121, %s123
      %p130 = scmp.eq.s32.totalorder %s22, 3
      %p131 = por %p129, %p130
      %p132 = scmp.ne.s32.totalorder %s123, %s124
      %p133 = scmp.eq.s32.totalorder %s22, 0
      %p134 = por %p132, %p133
      %p135 = scmp.ne.s32.totalorder %s123, %s124
      %p136 = scmp.eq.s32.totalorder %s23, 3
      %p137 = por %p135, %p136
      %p139 = scmp.ne.s32.totalorder %s124, %s138
      %p140 = scmp.eq.s32.totalorder %s23, 0
      %p141 = por %p139, %p140
      %s143 = sadd.s32 %s142, 1
      %p146 = scmp.eq.s32.totalorder %s17, 3
      %p147 = scmp.ne.s32.totalorder %s142, %s144
      %p148 = scmp.eq.s32.totalorder %s17, 0
      %p149 = por %p147, %p148
      %p150 = scmp.ne.s32.totalorder %s142, %s144
      %p151 = scmp.eq.s32.totalorder %s22, 3
      %p152 = por %p150, %p151
      %p153 = scmp.ne.s32.totalorder %s144, %s145
      %p154 = scmp.eq.s32.totalorder %s22, 0
      %p155 = por %p153, %p154
      %p156 = scmp.ne.s32.totalorder %s144, %s145
      %p157 = scmp.eq.s32.totalorder %s23, 3
      %p158 = por %p156, %p157
      %p160 = scmp.ne.s32.totalorder %s145, %s159
      %p161 = scmp.eq.s32.totalorder %s23, 0
      %p162 = por %p160, %p161
      %s163 = smul.u32 %s25, %s26
      %s164 = smul.u32 %s39, %s35
      %s165 = ssub.s32 %s24, %s43
      %s166 = ssub.s32 %s163, %s164
      %s167 = sor.u32 %s165, %s166
      %p168 = scmp.eq.s32.totalorder %s167, 0
      %s170 = sadd.s32 %s169, 1
      %s171 = scalar_select %p168, %s169, %s170
      %p174 = pneg %p168
      %p175 = scmp.eq.s32.totalorder %s17, 3
      %p176 = por %p174, %p175
      %p177 = scmp.ne.s32.totalorder %s169, %s172
      %p178 = scmp.eq.s32.totalorder %s17, 0
      %p179 = por %p177, %p178
      %p180 = scmp.ne.s32.totalorder %s169, %s172
      %p181 = scmp.eq.s32.totalorder %s22, 3
      %p182 = por %p180, %p181
      %p183 = scmp.ne.s32.totalorder %s172, %s173
      %p184 = scmp.eq.s32.totalorder %s22, 0
      %p185 = por %p183, %p184
      %p186 = scmp.ne.s32.totalorder %s172, %s173
      %p187 = scmp.eq.s32.totalorder %s23, 3
      %p188 = por %p186, %p187
      %p190 = scmp.ne.s32.totalorder %s173, %s189
      %p191 = scmp.eq.s32.totalorder %s23, 0
      %p192 = por %p190, %p191
      %p193 = scmp.le.s32.totalorder 1, %s17
      %p194 = scmp.lt.s32.totalorder %s17, 5
      %p195 = pnand %p193, %p194
      %p196 = pneg %p195
      // Predicated region
      $region9: #{tpu_custom_call.1} parent=5 // pred_check
        _
      $region10: #{tpu_custom_call.1} parent=5 // pred_check_branch
        %198 = sbr.rel (%p195) target = $region12
      $region11: #{tpu_custom_call.1} parent=5 // pred_region
        %s199 = ssub.s32 %s17, 1
        // Predicated region
        $region13: #{tpu_custom_call.1} parent=11 // pred_check
          %p200 = pneg %p113
        $region14: #{tpu_custom_call.1} parent=11 // pred_check_branch
          %202 = sbr.rel (%p200) target = $region16
        $region15: #{tpu_custom_call.1} parent=11 // pred_region
          _
        $region16: #{tpu_custom_call.1} parent=11 // pred_fallthru
          _
        // Predicated region
        $region17: #{tpu_custom_call.1} parent=11 // pred_check
          %p203 = pneg %p134
        $region18: #{tpu_custom_call.1} parent=11 // pred_check_branch
          %205 = sbr.rel (%p203) target = $region20
        $region19: #{tpu_custom_call.1} parent=11 // pred_region
          _
        $region20: #{tpu_custom_call.1} parent=11 // pred_fallthru
          _
        // Predicated region
        $region21: #{tpu_custom_call.1} parent=11 // pred_check
          %p206 = pneg %p155
        $region22: #{tpu_custom_call.1} parent=11 // pred_check_branch
          %208 = sbr.rel (%p206) target = $region24
        $region23: #{tpu_custom_call.1} parent=11 // pred_region
          _
        $region24: #{tpu_custom_call.1} parent=11 // pred_fallthru
          _
      $region12: #{tpu_custom_call.1} parent=5 // pred_fallthru
        _
      %p209 = scmp.lt.s32.totalorder %s17, 4
      // Predicated region
      $region25: #{tpu_custom_call.1} parent=5 // pred_check
        %p210 = pneg %p209
      $region26: #{tpu_custom_call.1} parent=5 // pred_check_branch
        %212 = sbr.rel (%p210) target = $region28
      $region27: #{tpu_custom_call.1} parent=5 // pred_region
        // Predicated region
        $region29: #{tpu_custom_call.1} parent=27 // pred_check
          %p213 = pneg %p58
        $region30: #{tpu_custom_call.1} parent=27 // pred_check_branch
          %215 = sbr.rel (%p213) target = $region32
        $region31: #{tpu_custom_call.1} parent=27 // pred_region
          %s216 = sand.u32 %s48, 1
          %s217 = scalar_lea.sflag [#allocation5], %s216
          %s218 = sand.u32 %s48, 1
          %s219 = smul.addr %s218, 32
          %s220 = scalar_lea.vmem [#allocation4], %s219
          %s221 = smul.u32 2, %s26
          %s223 = ssub.s32 512, 512
          %224 = vsyncadd %s217, %s223
          %s225 = smul.addr %s24, 4
          %s226 = sadd.s32 %s221, %s225
          %s227 = smul.addr %s226, 128
          %s228 = scalar_lea.hbm %s0, %s227
          %s229 = sshll.u32 %s220, 4
          %s230 = int_to_ptr.vmem [resolvable:$true] %s229
          %235 = dma.hbm_to_vmem [thread:$0]  %s228, 512, %s230, %s217, 256, 256, 16
        $region32: #{tpu_custom_call.1} parent=27 // pred_fallthru
          _
        // Predicated region
        $region33: #{tpu_custom_call.1} parent=27 // pred_check
          %p236 = pneg %p86
        $region34: #{tpu_custom_call.1} parent=27 // pred_check_branch
          %238 = sbr.rel (%p236) target = $region36
        $region35: #{tpu_custom_call.1} parent=27 // pred_region
          %s239 = smul.u32 2, %s26
          %p240 = scmp.lt.s32.totalorder %s24, 1
          %s241 = scalar_select %p240, %s24, 1
          %p242 = scmp.lt.s32.totalorder %s239, 1
          %s243 = scalar_select %p242, %s239, 1
          %s244 = smul.addr %s241, 2
          %s245 = sadd.s32 %s243, %s244
          %s246 = smul.addr %s245, 4
          %s247 = scalar_lea.vmem %s1, %s246
          %s248 = smul.u32 2, %s26
        $region36: #{tpu_custom_call.1} parent=27 // pred_fallthru
          _
      $region28: #{tpu_custom_call.1} parent=5 // pred_fallthru
        _
      %p249 = scmp.le.s32.totalorder 1, %s17
      %p250 = scmp.lt.s32.totalorder %s17, 5
      %p251 = pnand %p249, %p250
      %p252 = pneg %p251
      // Predicated region
      $region37: #{tpu_custom_call.1} parent=5 // pred_check
        _
      $region38: #{tpu_custom_call.1} parent=5 // pred_check_branch
        %254 = sbr.rel (%p251) target = $region40
      $region39: #{tpu_custom_call.1} parent=5 // pred_region
        %s255 = ssub.s32 %s17, 1
        %s256 = sand.u32 %s51, 1
        %s257 = scalar_lea.sflag [#allocation5], %s256
        %s258 = sand.u32 %s51, 1
        %s259 = smul.addr %s258, 32
        %s260 = scalar_lea.vmem [#allocation4], %s259
        // Predicated region
        $region41: #{tpu_custom_call.1} parent=39 // pred_check
          %p261 = pneg %p64
        $region42: #{tpu_custom_call.1} parent=39 // pred_check_branch
          %263 = sbr.rel (%p261) target = $region44
        $region43: #{tpu_custom_call.1} parent=39 // pred_region
          %264 = dma.done %s257, 512
        $region44: #{tpu_custom_call.1} parent=39 // pred_fallthru
          _
        %s265 = sand.u32 %s51, 1
        %s266 = scalar_lea.sflag [#allocation5], %s265
        %s267 = sand.u32 %s51, 1
        %s268 = smul.addr %s267, 32
        %s269 = scalar_lea.vmem [#allocation4], %s268
        %p270 = pneg %p64
        %p271 = pneg %p61
        %s272 = smul.u32 2, %s29
        %p273 = scmp.lt.s32.totalorder %s27, 1
        %s274 = scalar_select %p273, %s27, 1
        %p275 = scmp.lt.s32.totalorder %s272, 1
        %s276 = scalar_select %p275, %s272, 1
        %s277 = smul.addr %s274, 2
        %s278 = sadd.s32 %s276, %s277
        %s279 = smul.addr %s278, 4
        %s280 = scalar_lea.vmem %s1, %s279
        %p281 = pneg %p92
        %p282 = pneg %p89
        %p283 = pneg %p113
        %p284 = pneg %p110
        %p285 = pneg %p134
        %p286 = pneg %p131
        %p287 = pneg %p155
        %p288 = pneg %p152
        %p289 = pneg %p185
        %p290 = pneg %p182
        %s291 = sand.u32 %s172, 1
        %s292 = scalar_lea.sflag [#allocation6], %s291
        %s293 = sand.u32 %s172, 1
        %s294 = smul.addr %s293, 2
        %s295 = scalar_lea.vmem [#allocation7], %s294
        %s296 = smul.u32 2, %s29
        %s297 = smul.u32 2, %s29
        %p298 = scmp.lt.s32.totalorder %s27, 1
        %s299 = scalar_select %p298, %s27, 1
        %p300 = scmp.lt.s32.totalorder %s297, 1
        %s301 = scalar_select %p300, %s297, 1
        %s302 = smul.addr %s299, 2
        %s303 = sadd.s32 %s301, %s302
        %s304 = smul.addr %s303, 4
        %s305 = scalar_lea.vmem %s1, %s304
        %s306 = smul.u32 2, %s29
        %s307 = smul.u32 %s28, %s29
        %s308 = smul.u32 2, %s307
        %v309 = vld [vmem:[%s260] sm:$0xff]
        %v310 = vld [vmem:[%s260 + $0x8] sm:$0xff]
        %v311 = vld [vmem:[%s260 + $0x10] sm:$0xff]
        %v312 = vld [vmem:[%s260 + $0x18] sm:$0xff]
        %v313 = vld [vmem:[%s305] sm:$0xff]
        %v314 = vld [vmem:[%s4] sm:$0xff]
        %v315 = vld [vmem:[%s4 + $0x8] sm:$0xff]
        %v316 = vld [vmem:[%s2] sm:$0xff]
        %v317 = vld [vmem:[%s2 + $0x8] sm:$0xff]
        %v318 = vld [vmem:[%s3] sm:$0xff]
        %v319 = vld [vmem:[%s3 + $0x8] sm:$0xff]
        %v321 = vcombine.high %v313, %v313
        %vm322 = vcmask 31744
        %v324 = vsel %vm322, %v318, 0
        %v327 = vsel %vm322, %v319, 0
        %vm329 = vcmask 1043456
        %v330 = vsel %vm329, %v313, 0
        %v332 = vsel %vm329, %v321, 0
        %334 = vmatprep.subr.mxu0 0.0
        %335 = vmatpush1.msra.mxu0 0.0
        %336 = vmatprep.subr.mxu0 0.0
        %337 = vmatpush1.msra.mxu0 0.0
        %338 = vmatprep.subr.mxu0 0.0
        %339 = vmatpush1.msra.mxu0 0.0
        %340 = vmatprep.subr.mxu0 0.0
        %341 = vmatpush1.msra.mxu0 0.0
        %342 = vmatprep.subr.mxu0 0.0
        %343 = vmatpush1.msra.mxu0 0.0
        %344 = vmatprep.subr.mxu0 0.0
        %345 = vmatpush1.msra.mxu0 0.0
        %346 = vmatprep.subr.mxu0 0.0
        %347 = vmatpush1.msra.mxu0 0.0
        %348 = vmatprep.subr.mxu0 0.0
        %349 = vmatpush1.msra.mxu0 0.0
        %350 = vmatprep.subr.mxu0 0.0
        %351 = vmatpush1.msra.mxu0 0.0
        %352 = vmatprep.subr.mxu0 0.0
        %353 = vmatpush1.msra.mxu0 0.0
        %354 = vmatprep.subr.mxu0 0.0
        %355 = vmatpush1.msra.mxu0 0.0
        %356 = vmatprep.subr.mxu0 0.0
        %357 = vmatpush1.msra.mxu0 0.0
        %358 = vmatprep.subr.mxu0 0.0
        %359 = vmatpush1.msra.mxu0 0.0
        %360 = vmatprep.subr.mxu0 0.0
        %361 = vmatpush1.msra.mxu0 0.0
        %362 = vmatprep.subr.mxu0 0.0
        %363 = vmatpush1.msra.mxu0 0.0
        %364 = vmatprep.subr.mxu0 %v332
        %365 = vmatpush1.msra.mxu0 %v330
        %366 = vmatprep.subr.mxu0 0.0
        %367 = vmatpush2.msra.mxu0 0.0
        %368 = vmatprep.subr.mxu0 0.0
        %369 = vmatpush2.msra.mxu0 0.0
        %370 = vmatprep.subr.mxu0 0.0
        %371 = vmatpush2.msra.mxu0 0.0
        %372 = vmatprep.subr.mxu0 0.0
        %373 = vmatpush2.msra.mxu0 0.0
        %374 = vmatprep.subr.mxu0 0.0
        %375 = vmatpush2.msra.mxu0 0.0
        %376 = vmatprep.subr.mxu0 0.0
        %377 = vmatpush2.msra.mxu0 0.0
        %378 = vmatprep.subr.mxu0 0.0
        %379 = vmatpush2.msra.mxu0 0.0
        %380 = vmatprep.subr.mxu0 0.0
        %381 = vmatpush2.msra.mxu0 0.0
        %382 = vmatprep.subr.mxu0 0.0
        %383 = vmatpush2.msra.mxu0 0.0
        %384 = vmatprep.subr.mxu0 0.0
        %385 = vmatpush2.msra.mxu0 0.0
        %386 = vmatprep.subr.mxu0 0.0
        %387 = vmatpush2.msra.mxu0 0.0
        %388 = vmatprep.subr.mxu0 0.0
        %389 = vmatpush2.msra.mxu0 0.0
        %390 = vmatprep.subr.mxu0 0.0
        %391 = vmatpush2.msra.mxu0 0.0
        %392 = vmatprep.subr.mxu0 0.0
        %393 = vmatpush2.msra.mxu0 0.0
        %394 = vmatprep.subr.mxu0 0.0
        %395 = vmatpush2.msra.mxu0 0.0
        %396 = vmatprep.subr.mxu0 0.0
        %397 = vmatpush2.msra.mxu0 0.0
        %398 = vmatprep.mubr.f32.mxu0 0.0
        %399 = vmatmul.mubr.f32.gmra.mxu0 %v324
        %v400 = vpop.f32.mrf.mxu0
        %v401 = vadd.f32 0.0, %v400
        %v402 = vpop.f32.mrf.mxu0
        %v403 = vadd.f32 0.0, %v402
        %404 = vmatprep.mubr.f32.mxu0 0.0
        %405 = vmatmul.mubr.f32.gmra.mxu0 %v327
        %v406 = vpop.f32.mrf.mxu0
        %v407 = vadd.f32 0.0, %v406
        %v408 = vpop.f32.mrf.mxu0
        %v409 = vadd.f32 0.0, %v408
        %410 = vdwg.mxu0
        %vm411 = vcmask 130048
        %v413 = vsel %vm411, %v316, 0
        %v416 = vsel %vm411, %v317, 0
        %418 = vmatprep.subr.mxu0 0.0
        %419 = vmatpush1.msra.mxu0 0.0
        %420 = vmatprep.subr.mxu0 0.0
        %421 = vmatpush1.msra.mxu0 0.0
        %422 = vmatprep.subr.mxu0 0.0
        %423 = vmatpush1.msra.mxu0 0.0
        %424 = vmatprep.subr.mxu0 0.0
        %425 = vmatpush1.msra.mxu0 0.0
        %426 = vmatprep.subr.mxu0 0.0
        %427 = vmatpush1.msra.mxu0 0.0
        %428 = vmatprep.subr.mxu0 0.0
        %429 = vmatpush1.msra.mxu0 0.0
        %430 = vmatprep.subr.mxu0 0.0
        %431 = vmatpush1.msra.mxu0 0.0
        %432 = vmatprep.subr.mxu0 0.0
        %433 = vmatpush1.msra.mxu0 0.0
        %434 = vmatprep.subr.mxu0 0.0
        %435 = vmatpush1.msra.mxu0 0.0
        %436 = vmatprep.subr.mxu0 0.0
        %437 = vmatpush1.msra.mxu0 0.0
        %438 = vmatprep.subr.mxu0 0.0
        %439 = vmatpush1.msra.mxu0 0.0
        %440 = vmatprep.subr.mxu0 0.0
        %441 = vmatpush1.msra.mxu0 0.0
        %442 = vmatprep.subr.mxu0 0.0
        %443 = vmatpush1.msra.mxu0 0.0
        %444 = vmatprep.subr.mxu0 0.0
        %445 = vmatpush1.msra.mxu0 0.0
        %446 = vmatprep.subr.mxu0 %v312
        %447 = vmatpush1.msra.mxu0 %v311
        %448 = vmatprep.subr.mxu0 %v310
        %449 = vmatpush1.msra.mxu0 %v309
        %450 = vmatprep.subr.mxu0 0.0
        %451 = vmatpush2.msra.mxu0 0.0
        %452 = vmatprep.subr.mxu0 0.0
        %453 = vmatpush2.msra.mxu0 0.0
        %454 = vmatprep.subr.mxu0 0.0
        %455 = vmatpush2.msra.mxu0 0.0
        %456 = vmatprep.subr.mxu0 0.0
        %457 = vmatpush2.msra.mxu0 0.0
        %458 = vmatprep.subr.mxu0 0.0
        %459 = vmatpush2.msra.mxu0 0.0
        %460 = vmatprep.subr.mxu0 0.0
        %461 = vmatpush2.msra.mxu0 0.0
        %462 = vmatprep.subr.mxu0 0.0
        %463 = vmatpush2.msra.mxu0 0.0
        %464 = vmatprep.subr.mxu0 0.0
        %465 = vmatpush2.msra.mxu0 0.0
        %466 = vmatprep.subr.mxu0 0.0
        %467 = vmatpush2.msra.mxu0 0.0
        %468 = vmatprep.subr.mxu0 0.0
        %469 = vmatpush2.msra.mxu0 0.0
        %470 = vmatprep.subr.mxu0 0.0
        %471 = vmatpush2.msra.mxu0 0.0
        %472 = vmatprep.subr.mxu0 0.0
        %473 = vmatpush2.msra.mxu0 0.0
        %474 = vmatprep.subr.mxu0 0.0
        %475 = vmatpush2.msra.mxu0 0.0
        %476 = vmatprep.subr.mxu0 0.0
        %477 = vmatpush2.msra.mxu0 0.0
        %478 = vmatprep.subr.mxu0 0.0
        %479 = vmatpush2.msra.mxu0 0.0
        %480 = vmatprep.subr.mxu0 0.0
        %481 = vmatpush2.msra.mxu0 0.0
        %482 = vmatprep.mubr.f32.mxu0 0.0
        %483 = vmatmul.mubr.f32.gmra.mxu0 %v413
        %v484 = vpop.f32.mrf.mxu0
        %v485 = vadd.f32 %v401, %v484
        %v486 = vpop.f32.mrf.mxu0
        %v487 = vadd.f32 %v403, %v486
        %488 = vmatprep.mubr.f32.mxu0 0.0
        %489 = vmatmul.mubr.f32.gmra.mxu0 %v416
        %v490 = vpop.f32.mrf.mxu0
        %v491 = vadd.f32 %v407, %v490
        %v492 = vpop.f32.mrf.mxu0
        %v493 = vadd.f32 %v409, %v492
        %494 = vdwg.mxu0
        %496 = vset.pattern.permute.xlu0 0
        %497 = vperm.xlu0 %496, %v314
        %v498 = vpop.permute.xlu0 %497
        %501 = vset.pattern.permute.xlu0 0
        %502 = vperm.xlu0 %501, %v315
        %v503 = vpop.permute.xlu0 %502
        %v505 = vadd.f32 %v485, %v498
        %v506 = vadd.f32 %v487, %v498
        %v507 = vadd.f32 %v491, %v503
        %v508 = vadd.f32 %v493, %v503
        %p509 = scmp.eq.s32.totalorder %s28, 0
        %p510 = scmp.eq.s32.totalorder %s29, 0
        %p511 = pnand %p509, %p510
        %p512 = pneg %p511
        // Predicated region
        $region45: #{tpu_custom_call.1} parent=39 // pred_check
          _
        $region46: #{tpu_custom_call.1} parent=39 // pred_check_branch
          %514 = sbr.rel (%p511) target = $region48
        $region47: #{tpu_custom_call.1} parent=39 // pred_region
          %vm515 = vcmask 0
          %516 = vst.msk [vmem:[#allocation2] sm:$0x1] %vm515, 0.0
          %517 = vst.msk [vmem:[#allocation2 + $0x1] sm:$0x1] %vm515, 0.0
          %518 = vst.msk [vmem:[#allocation3] sm:$0x1] %vm515, 0.0
          %519 = vst.msk [vmem:[#allocation3 + $0x1] sm:$0x1] %vm515, 0.0
        $region48: #{tpu_custom_call.1} parent=39 // pred_fallthru
          _
        // Predicated region
        $region49: #{tpu_custom_call.1} parent=39 // pred_check
          %p520 = pneg %p509
        $region50: #{tpu_custom_call.1} parent=39 // pred_check_branch
          %522 = sbr.rel (%p520) target = $region52
        $region51: #{tpu_custom_call.1} parent=39 // pred_region
          %v523 = vld [vmem:[#allocation2] sm:$0x1]
          %v524 = vld [vmem:[#allocation2 + $0x1] sm:$0x1]
          %v525 = vadd.f32 %v505, %v506
          %526 = vadd.xlane.f32.xlu0 %v525
          %v527 = vpop.xlane.xlu0 %526
          %v528 = vadd.f32 %v507, %v508
          %529 = vadd.xlane.f32.xlu0 %v528
          %v530 = vpop.xlane.xlu0 %529
          %v531 = vrot.slane %v527, 4
          %v532 = vadd.f32 %v527, %v531
          %v533 = vrot.slane %v532, 2
          %v534 = vadd.f32 %v532, %v533
          %v535 = vrot.slane %v534, 1
          %v536 = vadd.f32 %v534, %v535
          %v537 = vrot.slane %v530, 4
          %v538 = vadd.f32 %v530, %v537
          %v539 = vrot.slane %v538, 2
          %v540 = vadd.f32 %v538, %v539
          %v541 = vrot.slane %v540, 1
          %v542 = vadd.f32 %v540, %v541
          %v543 = vadd.f32 %v523, %v536
          %v544 = vadd.f32 %v524, %v542
          %vm545 = vcmask 0
          %546 = vst.msk [vmem:[#allocation2] sm:$0x1] %vm545, %v543
          %547 = vst.msk [vmem:[#allocation2 + $0x1] sm:$0x1] %vm545, %v544
          %v548 = vld [vmem:[#allocation3] sm:$0x1]
          %v549 = vld [vmem:[#allocation3 + $0x1] sm:$0x1]
          %v550 = vmul.f32 %v505, %v505
          %v551 = vmul.f32 %v506, %v506
          %v552 = vmul.f32 %v507, %v507
          %v553 = vmul.f32 %v508, %v508
          %v554 = vadd.f32 %v550, %v551
          %555 = vadd.xlane.f32.xlu0 %v554
          %v556 = vpop.xlane.xlu0 %555
          %v557 = vadd.f32 %v552, %v553
          %558 = vadd.xlane.f32.xlu0 %v557
          %v559 = vpop.xlane.xlu0 %558
          %v560 = vrot.slane %v556, 4
          %v561 = vadd.f32 %v556, %v560
          %v562 = vrot.slane %v561, 2
          %v563 = vadd.f32 %v561, %v562
          %v564 = vrot.slane %v563, 1
          %v565 = vadd.f32 %v563, %v564
          %v566 = vrot.slane %v559, 4
          %v567 = vadd.f32 %v559, %v566
          %v568 = vrot.slane %v567, 2
          %v569 = vadd.f32 %v567, %v568
          %v570 = vrot.slane %v569, 1
          %v571 = vadd.f32 %v569, %v570
          %v572 = vadd.f32 %v548, %v565
          %v573 = vadd.f32 %v549, %v571
          %574 = vst.msk [vmem:[#allocation3] sm:$0x1] %vm545, %v572
          %575 = vst.msk [vmem:[#allocation3 + $0x1] sm:$0x1] %vm545, %v573
        $region52: #{tpu_custom_call.1} parent=39 // pred_fallthru
          _
        %p576 = scmp.eq.s32.totalorder %s28, 1
        // Predicated region
        $region53: #{tpu_custom_call.1} parent=39 // pred_check
          %p577 = pneg %p576
        $region54: #{tpu_custom_call.1} parent=39 // pred_check_branch
          %579 = sbr.rel (%p577) target = $region56
        $region55: #{tpu_custom_call.1} parent=39 // pred_region
          %v580 = vld [vmem:[#allocation2] sm:$0x1]
          %v581 = vld [vmem:[#allocation2 + $0x1] sm:$0x1]
          %v582 = vmul.f32 %v580, 0.00048828125
          %v583 = vmul.f32 %v581, 0.00048828125
          %v584 = vld [vmem:[#allocation3] sm:$0x1]
          %v585 = vld [vmem:[#allocation3 + $0x1] sm:$0x1]
          %v586 = vmul.f32 %v584, 0.00048828125
          %v587 = vmul.f32 %v585, 0.00048828125
          %v588 = vmul.f32 %v582, %v582
          %v589 = vmul.f32 %v583, %v583
          %v590 = vsub.f32 %v586, %v588
          %v591 = vsub.f32 %v587, %v589
          %v592 = vmax.f32 %v590, 0.0
          %v593 = vmax.f32 %v591, 0.0
          %v594 = vadd.f32 %v592, 1e-05
          %v595 = vadd.f32 %v593, 1e-05
          %v596 = vrsqrt.pop %v594
          %v597 = vrsqrt.pop %v595
          %v600 = vlaneseq
          %v601 = vshrl.u32 %v600, 7
          %v602 = vsub.s32 0, %v601
          %v603 = vrot.slane %v582, %v602
          %v604 = vlaneseq
          %v605 = vshrl.u32 %v604, 7
          %v606 = vsub.s32 0, %v605
          %v607 = vrot.slane %v583, %v606
          %608 = vset.pattern.permute.xlu0 0
          %609 = vperm.xlu0 %608, %v603
          %v610 = vpop.permute.xlu0 %609
          %612 = vset.pattern.permute.xlu0 0
          %613 = vperm.xlu0 %612, %v607
          %v614 = vpop.permute.xlu0 %613
          %v616 = vsub.f32 %v505, %v610
          %v617 = vsub.f32 %v506, %v610
          %v618 = vsub.f32 %v507, %v614
          %v619 = vsub.f32 %v508, %v614
          %v622 = vlaneseq
          %v623 = vshrl.u32 %v622, 7
          %v624 = vsub.s32 0, %v623
          %v625 = vrot.slane %v596, %v624
          %v626 = vlaneseq
          %v627 = vshrl.u32 %v626, 7
          %v628 = vsub.s32 0, %v627
          %v629 = vrot.slane %v597, %v628
          %630 = vset.pattern.permute.xlu0 0
          %631 = vperm.xlu0 %630, %v625
          %v632 = vpop.permute.xlu0 %631
          %634 = vset.pattern.permute.xlu0 0
          %635 = vperm.xlu0 %634, %v629
          %v636 = vpop.permute.xlu0 %635
          %v638 = vmul.f32 %v616, %v632
          %v639 = vmul.f32 %v617, %v632
          %v640 = vmul.f32 %v618, %v636
          %v641 = vmul.f32 %v619, %v636
          %642 = vset.pattern.permute.xlu0 1
          %643 = vperm.xlu0 %642, %v314
          %v644 = vpop.permute.xlu0 %643
          %646 = vset.pattern.permute.xlu0 1
          %647 = vperm.xlu0 %646, %v315
          %v648 = vpop.permute.xlu0 %647
          %v650 = vmul.f32 %v638, %v644
          %v651 = vmul.f32 %v639, %v644
          %v652 = vmul.f32 %v640, %v648
          %v653 = vmul.f32 %v641, %v648
          %654 = vset.pattern.permute.xlu0 2
          %655 = vperm.xlu0 %654, %v314
          %v656 = vpop.permute.xlu0 %655
          %658 = vset.pattern.permute.xlu0 2
          %659 = vperm.xlu0 %658, %v315
          %v660 = vpop.permute.xlu0 %659
          %v662 = vadd.f32 %v650, %v656
          %v663 = vadd.f32 %v651, %v656
          %v664 = vadd.f32 %v652, %v660
          %v665 = vadd.f32 %v653, %v660
          %v666 = vmax.f32 %v662, 0.0
          %v667 = vmax.f32 %v663, 0.0
          %v668 = vmax.f32 %v664, 0.0
          %v669 = vmax.f32 %v665, 0.0
          %670 = vset.pattern.permute.xlu0 3
          %671 = vperm.xlu0 %670, %v314
          %v672 = vpop.permute.xlu0 %671
          %674 = vset.pattern.permute.xlu0 3
          %675 = vperm.xlu0 %674, %v315
          %v676 = vpop.permute.xlu0 %675
          %v678 = vmul.f32 %v666, %v672
          %v679 = vmul.f32 %v667, %v672
          %v680 = vmul.f32 %v668, %v676
          %v681 = vmul.f32 %v669, %v676
          %v682 = vadd.f32 %v678, %v680
          %v683 = vrot.slane %v682, 4
          %v684 = vadd.f32 %v682, %v683
          %v685 = vrot.slane %v684, 2
          %v686 = vadd.f32 %v684, %v685
          %v687 = vrot.slane %v686, 1
          %v688 = vadd.f32 %v686, %v687
          %v689 = vadd.f32 %v679, %v681
          %v690 = vrot.slane %v689, 4
          %v691 = vadd.f32 %v689, %v690
          %v692 = vrot.slane %v691, 2
          %v693 = vadd.f32 %v691, %v692
          %v694 = vrot.slane %v693, 1
          %v695 = vadd.f32 %v693, %v694
          %v698 = vcombine.low %v688, %v695
          %v700 = vunpack.c.l.s4 1966171168
          %v701 = vunpack.c.0.s8 %v700
          %v702 = vlaneseq
          %v703 = vshrl.u32 %v702, 7
          %v704 = vsub.s32 %v701, %v703
          %v705 = vrot.slane %v698, %v704
          %v707 = vunpack.c.l.s4 1966171168
          %v708 = vunpack.c.0.s8 %v707
          %v709 = vlaneseq
          %v710 = vshrl.u32 %v709, 7
          %v711 = vsub.s32 %v708, %v710
          %v712 = vrot.slane %v705, %v711
          %v714 = vlaneseq
          %vm715 = vcmp.ge.s32.totalorder %v714, 0
          %vm716 = vcmp.lt.s32.totalorder %v714, 256
          %vm717 = vmand %vm715, %vm716
          %718 = vst.msk [vmem:[%s295] sm:$0x3] %vm717, %v712
        $region56: #{tpu_custom_call.1} parent=39 // pred_fallthru
          _
        %s719 = sand.u32 %s172, 1
        %s720 = scalar_lea.sflag [#allocation6], %s719
        %s721 = sand.u32 %s172, 1
        %s722 = smul.addr %s721, 2
        %s723 = scalar_lea.vmem [#allocation7], %s722
        // Predicated region
        $region57: #{tpu_custom_call.1} parent=39 // pred_check
          %p724 = pneg %p182
        $region58: #{tpu_custom_call.1} parent=39 // pred_check_branch
          %726 = sbr.rel (%p724) target = $region60
        $region59: #{tpu_custom_call.1} parent=39 // pred_region
          %s727 = smul.u32 %s28, %s29
          %s728 = smul.u32 2, %s727
          %s730 = ssub.s32 32, 32
          %731 = vsyncadd %s720, %s730
          %s732 = smul.addr %s27, 2
          %s733 = sadd.s32 %s728, %s732
          %s734 = smul.addr %s733, 16
          %s735 = scalar_lea.hbm %s5, %s734
          %s737 = sshll.u32 %s723, 4
          %s738 = int_to_ptr.vmem [resolvable:$true] %s737
          %740 = dma.vmem_to_hbm [thread:$0]  %s738, 32, %s735, %s720
        $region60: #{tpu_custom_call.1} parent=39 // pred_fallthru
          _
      $region40: #{tpu_custom_call.1} parent=5 // pred_fallthru
        _
      %p741 = scmp.le.s32.totalorder 2, %s17
      // Predicated region
      $region61: #{tpu_custom_call.1} parent=5 // pred_check
        %p742 = pneg %p741
      $region62: #{tpu_custom_call.1} parent=5 // pred_check_branch
        %744 = sbr.rel (%p742) target = $region64
      $region63: #{tpu_custom_call.1} parent=5 // pred_region
        %s745 = ssub.s32 %s17, 2
        // Predicated region
        $region65: #{tpu_custom_call.1} parent=63 // pred_check
          %p746 = pneg %p188
        $region66: #{tpu_custom_call.1} parent=63 // pred_check_branch
          %748 = sbr.rel (%p746) target = $region68
        $region67: #{tpu_custom_call.1} parent=63 // pred_region
          %s749 = sand.u32 %s173, 1
          %s750 = scalar_lea.sflag [#allocation6], %s749
          %s751 = sand.u32 %s173, 1
          %s752 = smul.addr %s751, 2
          %s753 = scalar_lea.vmem [#allocation7], %s752
          %754 = dma.done %s750, 32
        $region68: #{tpu_custom_call.1} parent=63 // pred_fallthru
          _
      $region64: #{tpu_custom_call.1} parent=5 // pred_fallthru
        _
    $region6: #{tpu_custom_call.1} parent=1 // loop_footer
      %s21 = sadd.s32 1, %s17
    $region7: #{tpu_custom_call.1} parent=1 // loop_footer_branch
      %16 = sbr.rel target = $region3
    $region8: #{tpu_custom_call.1} parent=1 // loop_exit
      _
    %755 = vsyncpa [#allocation5], 1
    %s756 = scalar_lea.sflag [#allocation5], 1
    %757 = vsyncpa %s756, 1
    %758 = vsyncpa [#allocation6], 1
    %s759 = scalar_lea.sflag [#allocation6], 1
    %760 = vsyncpa %s759, 1

</llo_original>
